<compile_context>
chip_gen: v5e
topology: v5e:2x2
jax: 0.10.0
libtpu: 0.0.40
codegen_flags: <defaults>
</compile_context>

<pallas_src>
import numpy as np
import jax
import jax.numpy as jnp
from jax.experimental import pallas as pl
from jax.experimental.pallas import tpu as pltpu


def _round_up(x: int, m: int) -> int:
    return (x + m - 1) // m * m


def _multiterm_partial_kernel(logits_ref, pmask_ref, nmask_ref, label_ref, sampw_ref,
                              out_ref, s0_ref, c0_ref, s1_ref, c1_ref):
    """Accumulates per-batch-block partial sums over pixel tiles.

    Grid = (batch_blocks, pixel_tiles); pixel axis is the reduction axis (last,
    'arbitrary').  Tiny (TB, 1) scratch accumulators are zeroed at the first pixel
    tile, fed by a per-tile lane reduction, and packed into the lane-dense output
    row at the last pixel tile.
    """
    ni = pl.program_id(1)

    @pl.when(ni == 0)
    def _():
        s0_ref[...] = jnp.zeros_like(s0_ref)
        c0_ref[...] = jnp.zeros_like(c0_ref)
        s1_ref[...] = jnp.zeros_like(s1_ref)
        c1_ref[...] = jnp.zeros_like(c1_ref)

    # Cast at the point of use (inputs arrive in native dtype, e.g. bf16).
    z = logits_ref[...].astype(jnp.float32)        # (TB, TN)
    pm = pmask_ref[...].astype(jnp.float32)        # (TB, TN)
    nm = nmask_ref[...].astype(jnp.float32)        # (TB, TN)
    y = label_ref[...].astype(jnp.float32)         # (TB, 1)  broadcast over lanes
    sw = sampw_ref[...].astype(jnp.float32)        # (TB, 1)  per-core weight (hoisted)

    # Numerically stable BCE-with-logits (VPU + EUP work only).
    bce = jnp.maximum(z, 0.0) - z * y + jnp.log1p(jnp.exp(-jnp.abs(z)))

    m1 = nm > 0.5                         # needle region
    m0 = jnp.logical_and(m1, pm > 0.3)    # valid region = prostate & needle

    one = jnp.ones_like(bce)
    # Lane reductions per tile (XLU has spare slots here); accumulate tiny
    # per-row partials instead of full-tile accumulators.
    s0_ref[...] += jnp.sum(jnp.where(m0, bce, 0.0), axis=-1, keepdims=True)
    c0_ref[...] += jnp.sum(jnp.where(m0, one, 0.0), axis=-1, keepdims=True)
    s1_ref[...] += jnp.sum(jnp.where(m1, bce * sw, 0.0), axis=-1, keepdims=True)
    c1_ref[...] += jnp.sum(jnp.where(m1, one, 0.0), axis=-1, keepdims=True)

    @pl.when(ni == pl.num_programs(1) - 1)
    def _():
        # Final (tiny) sublane reductions, once per batch block.
        s0 = jnp.sum(s0_ref[...])
        c0 = jnp.sum(c0_ref[...])
        s1 = jnp.sum(s1_ref[...])
        c1 = jnp.sum(c1_ref[...])
        # Pack the four scalars into a single lane-dense vreg (unmasked store).
        lane = jax.lax.broadcasted_iota(jnp.int32, (1, 8, 128), 2)
        packed = jnp.where(lane == 0, s0,
                 jnp.where(lane == 1, c0,
                 jnp.where(lane == 2, s1,
                 jnp.where(lane == 3, c1, 0.0))))
        out_ref[...] = packed


def multi_term_can_det_loss(cancer_logits, prostate_mask, needle_mask, label,
                            involvement, weights=(1.0, 0.5), tn_max=8192):
    """Pallas-backed equivalent of MultiTermCanDetLoss([...], weights).forward."""
    B = int(cancer_logits.shape[0])
    N = 1
    for d in cancer_logits.shape[1:]:
        N *= int(d)

    # Keep the big slabs in their native dtype; cast happens inside the kernel.
    logits2d = cancer_logits.reshape(B, N)
    pmask2d = prostate_mask.reshape(B, N)
    nmask2d = needle_mask.reshape(B, N)
    label1d = label.reshape(B).astype(jnp.float32)
    inv1d = involvement.reshape(B).astype(jnp.float32)
    # Hoist the per-core weight out of the pixel loop entirely.
    samp_w = jnp.where(label1d > 0.5, inv1d, 1.0)

    # Batch tile: sublane-aligned, large enough to amortize per-step overhead.
    TB = min(_round_up(B, 8), 64)
    B_pad = _round_up(B, TB)

    # Pixel tile: lane-aligned multiple of 128.
    N_pad128 = _round_up(N, 128)
    TN = max(128, (min(int(tn_max), N_pad128) // 128) * 128)
    N_pad = _round_up(N, TN)

    pad_b = B_pad - B
    pad_n = N_pad - N
    if pad_b or pad_n:
        # Zero padding is semantically inert: padded needle_mask==0 excludes
        # those pixels from both terms' sums and counts.
        logits2d = jnp.pad(logits2d, ((0, pad_b), (0, pad_n)))
        pmask2d = jnp.pad(pmask2d, ((0, pad_b), (0, pad_n)))
        nmask2d = jnp.pad(nmask2d, ((0, pad_b), (0, pad_n)))
    label2d = jnp.pad(label1d, (0, pad_b)).reshape(B_pad, 1)
    sampw2d = jnp.pad(samp_w, (0, pad_b)).reshape(B_pad, 1)

    GB = B_pad // TB
    GN = N_pad // TN

    partials = pl.pallas_call(
        _multiterm_partial_kernel,
        out_shape=jax.ShapeDtypeStruct((GB, 8, 128), jnp.float32),
        grid_spec=pltpu.PrefetchScalarGridSpec(
            num_scalar_prefetch=0,
            grid=(GB, GN),
            in_specs=[
                pl.BlockSpec((TB, TN), lambda bi, ni: (bi, ni)),
                pl.BlockSpec((TB, TN), lambda bi, ni: (bi, ni)),
                pl.BlockSpec((TB, TN), lambda bi, ni: (bi, ni)),
                pl.BlockSpec((TB, 1), lambda bi, ni: (bi, 0)),
                pl.BlockSpec((TB, 1), lambda bi, ni: (bi, 0)),
            ],
            out_specs=pl.BlockSpec((1, 8, 128), lambda bi, ni: (bi, 0, 0)),
            scratch_shapes=[pltpu.VMEM((TB, 1), jnp.float32)] * 4,
        ),
        compiler_params=pltpu.CompilerParams(
            dimension_semantics=("parallel", "arbitrary"),
            vmem_limit_bytes=32 * 1024 * 1024,
        ),
    )(logits2d, pmask2d, nmask2d, label2d, sampw2d)

    # Tiny epilogue: combine per-batch-block partials into the scalar loss.
    s0 = jnp.sum(partials[:, 0, 0])
    c0 = jnp.sum(partials[:, 0, 1])
    s1 = jnp.sum(partials[:, 0, 2])
    c1 = jnp.sum(partials[:, 0, 3])
    t0 = s0 / jnp.maximum(c0, 1.0)
    t1 = s1 / jnp.maximum(c1, 1.0)
    w0, w1 = float(weights[0]), float(weights[1])
    return (w0 * t0 + w1 * t1).astype(jnp.float32)


def _reference_loss(cancer_logits, prostate_mask, needle_mask, label, involvement,
                    weights):
    """Pure-jnp reference of the same two-term loss (for a sanity check)."""
    B = cancer_logits.shape[0]
    z = cancer_logits.reshape(B, -1).astype(jnp.float32)
    pm = prostate_mask.reshape(B, -1).astype(jnp.float32)
    nm = needle_mask.reshape(B, -1).astype(jnp.float32)
    y = label.reshape(B, 1).astype(jnp.float32)
    inv = involvement.reshape(B, 1).astype(jnp.float32)
    bce = jnp.maximum(z, 0.0) - z * y + jnp.log1p(jnp.exp(-jnp.abs(z)))
    m1 = nm > 0.5
    m0 = jnp.logical_and(m1, pm > 0.3)
    sw = jnp.where(y > 0.5, inv, 1.0)
    t0 = jnp.sum(jnp.where(m0, bce, 0.0)) / jnp.maximum(jnp.sum(m0.astype(jnp.float32)), 1.0)
    t1 = jnp.sum(jnp.where(m1, bce * sw, 0.0)) / jnp.maximum(jnp.sum(m1.astype(jnp.float32)), 1.0)
    return float(weights[0]) * t0 + float(weights[1]) * t1


if __name__ == "__main__":
    key = jax.random.PRNGKey(0)
    kz, kp, kn, kl, ki = jax.random.split(key, 5)

    B, C, H, W = 2, 1, 16, 16  # NCHW, like the PyTorch module's conv inputs
    # Big slabs in bf16 (native dtype goes straight to the kernel; cast in-kernel).
    cancer_logits = jax.random.normal(kz, (B, C, H, W), dtype=jnp.float32).astype(jnp.bfloat16)
    prostate_mask = jax.random.uniform(kp, (B, C, H, W), dtype=jnp.float32).astype(jnp.bfloat16)
    needle_mask = jax.random.uniform(kn, (B, C, H, W), dtype=jnp.float32).astype(jnp.bfloat16)
    label = jax.random.bernoulli(kl, 0.5, (B,)).astype(jnp.float32)
    involvement = jax.random.uniform(ki, (B,), dtype=jnp.float32)

    # Deterministic "module parameters": the per-term weights.
    weights = (1.0, 0.5)

    loss = multi_term_can_det_loss(
        cancer_logits, prostate_mask, needle_mask, label, involvement, weights)
    loss = jax.block_until_ready(loss)
    assert loss.dtype == jnp.float32 and loss.shape == ()

    ref = _reference_loss(
        cancer_logits, prostate_mask, needle_mask, label, involvement, weights)
    np.testing.assert_allclose(np.asarray(loss), np.asarray(ref), rtol=1e-3, atol=1e-5)

    print("KERNEL_OK")
</pallas_src>

<mosaic_0001>
module attributes {stable_mosaic.version = 11 : i64} {
  func.func @_multiterm_partial_kernel(%arg0: i32, %arg1: i32, %arg2: memref<8x256xbf16, #tpu.memory_space<vmem>>, %arg3: memref<8x256xbf16, #tpu.memory_space<vmem>>, %arg4: memref<8x256xbf16, #tpu.memory_space<vmem>>, %arg5: memref<8x1xf32, #tpu.memory_space<vmem>>, %arg6: memref<8x1xf32, #tpu.memory_space<vmem>>, %arg7: memref<1x8x128xf32, #tpu.memory_space<vmem>>, %arg8: memref<8x1xf32, #tpu.memory_space<vmem>>, %arg9: memref<8x1xf32, #tpu.memory_space<vmem>>, %arg10: memref<8x1xf32, #tpu.memory_space<vmem>>, %arg11: memref<8x1xf32, #tpu.memory_space<vmem>>) attributes {dimension_semantics = [#tpu.dimension_semantics<parallel>, #tpu.dimension_semantics<arbitrary>], iteration_bounds = array<i64: 1, 1>, scalar_prefetch = 0 : i64, scratch_operands = 4 : i64, tpu.core_type = #tpu.core_type<tc>, window_params = [{transform_indices = @transform_0, window_bounds = array<i64: 8, 256>}, {transform_indices = @transform_1, window_bounds = array<i64: 8, 256>}, {transform_indices = @transform_2, window_bounds = array<i64: 8, 256>}, {transform_indices = @transform_3, window_bounds = array<i64: 8, 1>}, {transform_indices = @transform_4, window_bounds = array<i64: 8, 1>}, {transform_indices = @transform_5, window_bounds = array<i64: 1, 8, 128>}]} {
    %c0_i32 = arith.constant 0 : i32
    %0 = arith.cmpi eq, %arg1, %c0_i32 : i32
    %1 = arith.extui %0 : i1 to i32
    %c0_i32_0 = arith.constant 0 : i32
    %2 = arith.cmpi ne, %1, %c0_i32_0 : i32
    scf.if %2 {
      %cst_40 = arith.constant 0.000000e+00 : f32
      %61 = vector.broadcast %cst_40 : f32 to vector<8x1xf32>
      %c0_41 = arith.constant 0 : index
      %c0_42 = arith.constant 0 : index
      %62 = vector.load %arg8[%c0_41, %c0_42] : memref<8x1xf32, #tpu.memory_space<vmem>>, vector<8x1xf32>
      tpu.vector_store %arg8[%c0_41, %c0_42], %61 {strides = array<i32>} : memref<8x1xf32, #tpu.memory_space<vmem>>, vector<8x1xf32>,
      %cst_43 = arith.constant 0.000000e+00 : f32
      %63 = vector.broadcast %cst_43 : f32 to vector<8x1xf32>
      %c0_44 = arith.constant 0 : index
      %c0_45 = arith.constant 0 : index
      %64 = vector.load %arg9[%c0_44, %c0_45] : memref<8x1xf32, #tpu.memory_space<vmem>>, vector<8x1xf32>
      tpu.vector_store %arg9[%c0_44, %c0_45], %63 {strides = array<i32>} : memref<8x1xf32, #tpu.memory_space<vmem>>, vector<8x1xf32>,
      %cst_46 = arith.constant 0.000000e+00 : f32
      %65 = vector.broadcast %cst_46 : f32 to vector<8x1xf32>
      %c0_47 = arith.constant 0 : index
      %c0_48 = arith.constant 0 : index
      %66 = vector.load %arg10[%c0_47, %c0_48] : memref<8x1xf32, #tpu.memory_space<vmem>>, vector<8x1xf32>
      tpu.vector_store %arg10[%c0_47, %c0_48], %65 {strides = array<i32>} : memref<8x1xf32, #tpu.memory_space<vmem>>, vector<8x1xf32>,
      %cst_49 = arith.constant 0.000000e+00 : f32
      %67 = vector.broadcast %cst_49 : f32 to vector<8x1xf32>
      %c0_50 = arith.constant 0 : index
      %c0_51 = arith.constant 0 : index
      %68 = vector.load %arg11[%c0_50, %c0_51] : memref<8x1xf32, #tpu.memory_space<vmem>>, vector<8x1xf32>
      tpu.vector_store %arg11[%c0_50, %c0_51], %67 {strides = array<i32>} : memref<8x1xf32, #tpu.memory_space<vmem>>, vector<8x1xf32>,
    } else {
    }
    %c0 = arith.constant 0 : index
    %c0_1 = arith.constant 0 : index
    %3 = vector.load %arg2[%c0, %c0_1] : memref<8x256xbf16, #tpu.memory_space<vmem>>, vector<8x256xbf16>
    %4 = arith.extf %3 : vector<8x256xbf16> to vector<8x256xf32>
    %c0_2 = arith.constant 0 : index
    %c0_3 = arith.constant 0 : index
    %5 = vector.load %arg3[%c0_2, %c0_3] : memref<8x256xbf16, #tpu.memory_space<vmem>>, vector<8x256xbf16>
    %6 = arith.extf %5 : vector<8x256xbf16> to vector<8x256xf32>
    %c0_4 = arith.constant 0 : index
    %c0_5 = arith.constant 0 : index
    %7 = vector.load %arg4[%c0_4, %c0_5] : memref<8x256xbf16, #tpu.memory_space<vmem>>, vector<8x256xbf16>
    %8 = arith.extf %7 : vector<8x256xbf16> to vector<8x256xf32>
    %c0_6 = arith.constant 0 : index
    %c0_7 = arith.constant 0 : index
    %9 = vector.load %arg5[%c0_6, %c0_7] : memref<8x1xf32, #tpu.memory_space<vmem>>, vector<8x1xf32>
    %c0_8 = arith.constant 0 : index
    %c0_9 = arith.constant 0 : index
    %10 = vector.load %arg6[%c0_8, %c0_9] : memref<8x1xf32, #tpu.memory_space<vmem>>, vector<8x1xf32>
    %cst = arith.constant 0.000000e+00 : f32
    %11 = vector.broadcast %cst : f32 to vector<8x256xf32>
    %12 = arith.maximumf %4, %11 : vector<8x256xf32>
    %13 = vector.broadcast %9 : vector<8x1xf32> to vector<8x256xf32>
    %14 = arith.mulf %4, %13 : vector<8x256xf32>
    %15 = arith.subf %12, %14 : vector<8x256xf32>
    %16 = math.absf %4 : vector<8x256xf32>
    %cst_10 = arith.constant 0.000000e+00 : f32
    %17 = vector.broadcast %cst_10 : f32 to vector<8x256xf32>
    %18 = arith.subf %17, %16 : vector<8x256xf32>
    %19 = math.exp %18 : vector<8x256xf32>
    %20 = math.log1p %19 : vector<8x256xf32>
    %21 = arith.addf %15, %20 : vector<8x256xf32>
    %cst_11 = arith.constant 5.000000e-01 : f32
    %22 = vector.broadcast %cst_11 : f32 to vector<8x256xf32>
    %23 = arith.cmpf ogt, %8, %22 : vector<8x256xf32>
    %cst_12 = arith.constant 3.000000e-01 : f32
    %24 = vector.broadcast %cst_12 : f32 to vector<8x256xf32>
    %25 = arith.cmpf ogt, %6, %24 : vector<8x256xf32>
    %26 = arith.andi %23, %25 : vector<8x256xi1>
    %cst_13 = arith.constant 1.000000e+00 : f32
    %27 = vector.broadcast %cst_13 : f32 to vector<8x256xf32>
    %c0_14 = arith.constant 0 : index
    %c0_15 = arith.constant 0 : index
    %28 = vector.load %arg8[%c0_14, %c0_15] : memref<8x1xf32, #tpu.memory_space<vmem>>, vector<8x1xf32>
    %cst_16 = arith.constant 0.000000e+00 : f32
    %29 = vector.broadcast %cst_16 : f32 to vector<8x256xf32>
    %30 = arith.select %26, %21, %29 : vector<8x256xi1>, vector<8x256xf32>
    %cst_17 = arith.constant dense<0.000000e+00> : vector<8xf32>
    %31 = vector.multi_reduction <add>, %30, %cst_17 [1] : vector<8x256xf32> to vector<8xf32>
    %32 = vector.shape_cast %31 : vector<8xf32> to vector<8x1xf32>
    %33 = arith.addf %28, %32 : vector<8x1xf32>
    %c0_18 = arith.constant 0 : index
    %c0_19 = arith.constant 0 : index
    %34 = vector.load %arg8[%c0_18, %c0_19] : memref<8x1xf32, #tpu.memory_space<vmem>>, vector<8x1xf32>
    tpu.vector_store %arg8[%c0_18, %c0_19], %33 {strides = array<i32>} : memref<8x1xf32, #tpu.memory_space<vmem>>, vector<8x1xf32>,
    %c0_20 = arith.constant 0 : index
    %c0_21 = arith.constant 0 : index
    %35 = vector.load %arg9[%c0_20, %c0_21] : memref<8x1xf32, #tpu.memory_space<vmem>>, vector<8x1xf32>
    %cst_22 = arith.constant 0.000000e+00 : f32
    %36 = vector.broadcast %cst_22 : f32 to vector<8x256xf32>
    %37 = arith.select %26, %27, %36 : vector<8x256xi1>, vector<8x256xf32>
    %cst_23 = arith.constant dense<0.000000e+00> : vector<8xf32>
    %38 = vector.multi_reduction <add>, %37, %cst_23 [1] : vector<8x256xf32> to vector<8xf32>
    %39 = vector.shape_cast %38 : vector<8xf32> to vector<8x1xf32>
    %40 = arith.addf %35, %39 : vector<8x1xf32>
    %c0_24 = arith.constant 0 : index
    %c0_25 = arith.constant 0 : index
    %41 = vector.load %arg9[%c0_24, %c0_25] : memref<8x1xf32, #tpu.memory_space<vmem>>, vector<8x1xf32>
    tpu.vector_store %arg9[%c0_24, %c0_25], %40 {strides = array<i32>} : memref<8x1xf32, #tpu.memory_space<vmem>>, vector<8x1xf32>,
    %c0_26 = arith.constant 0 : index
    %c0_27 = arith.constant 0 : index
    %42 = vector.load %arg10[%c0_26, %c0_27] : memref<8x1xf32, #tpu.memory_space<vmem>>, vector<8x1xf32>
    %43 = vector.broadcast %10 : vector<8x1xf32> to vector<8x256xf32>
    %44 = arith.mulf %21, %43 : vector<8x256xf32>
    %cst_28 = arith.constant 0.000000e+00 : f32
    %45 = vector.broadcast %cst_28 : f32 to vector<8x256xf32>
    %46 = arith.select %23, %44, %45 : vector<8x256xi1>, vector<8x256xf32>
    %cst_29 = arith.constant dense<0.000000e+00> : vector<8xf32>
    %47 = vector.multi_reduction <add>, %46, %cst_29 [1] : vector<8x256xf32> to vector<8xf32>
    %48 = vector.shape_cast %47 : vector<8xf32> to vector<8x1xf32>
    %49 = arith.addf %42, %48 : vector<8x1xf32>
    %c0_30 = arith.constant 0 : index
    %c0_31 = arith.constant 0 : index
    %50 = vector.load %arg10[%c0_30, %c0_31] : memref<8x1xf32, #tpu.memory_space<vmem>>, vector<8x1xf32>
    tpu.vector_store %arg10[%c0_30, %c0_31], %49 {strides = array<i32>} : memref<8x1xf32, #tpu.memory_space<vmem>>, vector<8x1xf32>,
    %c0_32 = arith.constant 0 : index
    %c0_33 = arith.constant 0 : index
    %51 = vector.load %arg11[%c0_32, %c0_33] : memref<8x1xf32, #tpu.memory_space<vmem>>, vector<8x1xf32>
    %cst_34 = arith.constant 0.000000e+00 : f32
    %52 = vector.broadcast %cst_34 : f32 to vector<8x256xf32>
    %53 = arith.select %23, %27, %52 : vector<8x256xi1>, vector<8x256xf32>
    %cst_35 = arith.constant dense<0.000000e+00> : vector<8xf32>
    %54 = vector.multi_reduction <add>, %53, %cst_35 [1] : vector<8x256xf32> to vector<8xf32>
    %55 = vector.shape_cast %54 : vector<8xf32> to vector<8x1xf32>
    %56 = arith.addf %51, %55 : vector<8x1xf32>
    %c0_36 = arith.constant 0 : index
    %c0_37 = arith.constant 0 : index
    %57 = vector.load %arg11[%c0_36, %c0_37] : memref<8x1xf32, #tpu.memory_space<vmem>>, vector<8x1xf32>
    tpu.vector_store %arg11[%c0_36, %c0_37], %56 {strides = array<i32>} : memref<8x1xf32, #tpu.memory_space<vmem>>, vector<8x1xf32>,
    %c0_i32_38 = arith.constant 0 : i32
    %58 = arith.cmpi eq, %arg1, %c0_i32_38 : i32
    %59 = arith.extui %58 : i1 to i32
    %c0_i32_39 = arith.constant 0 : i32
    %60 = arith.cmpi ne, %59, %c0_i32_39 : i32
    scf.if %60 {
      %c0_40 = arith.constant 0 : index
      %c0_41 = arith.constant 0 : index
      %61 = vector.load %arg8[%c0_40, %c0_41] : memref<8x1xf32, #tpu.memory_space<vmem>>, vector<8x1xf32>
      %62 = vector.shape_cast %61 : vector<8x1xf32> to vector<1x8x1xf32>
      %cst_42 = arith.constant dense<0.000000e+00> : vector<1xf32>
      %63 = vector.multi_reduction <add>, %62, %cst_42 [1, 2] : vector<1x8x1xf32> to vector<1xf32>
      %64 = vector.shape_cast %63 : vector<1xf32> to vector<1x1x1xf32>
      %65 = vector.extract %64[0, 0, 0] : f32 from vector<1x1x1xf32>
      %c0_43 = arith.constant 0 : index
      %c0_44 = arith.constant 0 : index
      %66 = vector.load %arg9[%c0_43, %c0_44] : memref<8x1xf32, #tpu.memory_space<vmem>>, vector<8x1xf32>
      %67 = vector.shape_cast %66 : vector<8x1xf32> to vector<1x8x1xf32>
      %cst_45 = arith.constant dense<0.000000e+00> : vector<1xf32>
      %68 = vector.multi_reduction <add>, %67, %cst_45 [1, 2] : vector<1x8x1xf32> to vector<1xf32>
      %69 = vector.shape_cast %68 : vector<1xf32> to vector<1x1x1xf32>
      %70 = vector.extract %69[0, 0, 0] : f32 from vector<1x1x1xf32>
      %c0_46 = arith.constant 0 : index
      %c0_47 = arith.constant 0 : index
      %71 = vector.load %arg10[%c0_46, %c0_47] : memref<8x1xf32, #tpu.memory_space<vmem>>, vector<8x1xf32>
      %72 = vector.shape_cast %71 : vector<8x1xf32> to vector<1x8x1xf32>
      %cst_48 = arith.constant dense<0.000000e+00> : vector<1xf32>
      %73 = vector.multi_reduction <add>, %72, %cst_48 [1, 2] : vector<1x8x1xf32> to vector<1xf32>
      %74 = vector.shape_cast %73 : vector<1xf32> to vector<1x1x1xf32>
      %75 = vector.extract %74[0, 0, 0] : f32 from vector<1x1x1xf32>
      %c0_49 = arith.constant 0 : index
      %c0_50 = arith.constant 0 : index
      %76 = vector.load %arg11[%c0_49, %c0_50] : memref<8x1xf32, #tpu.memory_space<vmem>>, vector<8x1xf32>
      %77 = vector.shape_cast %76 : vector<8x1xf32> to vector<1x8x1xf32>
      %cst_51 = arith.constant dense<0.000000e+00> : vector<1xf32>
      %78 = vector.multi_reduction <add>, %77, %cst_51 [1, 2] : vector<1x8x1xf32> to vector<1xf32>
      %79 = vector.shape_cast %78 : vector<1xf32> to vector<1x1x1xf32>
      %80 = vector.extract %79[0, 0, 0] : f32 from vector<1x1x1xf32>
      %81 = tpu.iota {dimensions = array<i32: 2>} : vector<1x8x128xi32>
      %c0_i32_52 = arith.constant 0 : i32
      %82 = vector.broadcast %c0_i32_52 : i32 to vector<1x8x128xi32>
      %83 = arith.cmpi eq, %81, %82 : vector<1x8x128xi32>
      %c1_i32 = arith.constant 1 : i32
      %84 = vector.broadcast %c1_i32 : i32 to vector<1x8x128xi32>
      %85 = arith.cmpi eq, %81, %84 : vector<1x8x128xi32>
      %c2_i32 = arith.constant 2 : i32
      %86 = vector.broadcast %c2_i32 : i32 to vector<1x8x128xi32>
      %87 = arith.cmpi eq, %81, %86 : vector<1x8x128xi32>
      %c3_i32 = arith.constant 3 : i32
      %88 = vector.broadcast %c3_i32 : i32 to vector<1x8x128xi32>
      %89 = arith.cmpi eq, %81, %88 : vector<1x8x128xi32>
      %cst_53 = arith.constant 0.000000e+00 : f32
      %90 = vector.broadcast %80 : f32 to vector<1x8x128xf32>
      %91 = vector.broadcast %cst_53 : f32 to vector<1x8x128xf32>
      %92 = arith.select %89, %90, %91 : vector<1x8x128xi1>, vector<1x8x128xf32>
      %93 = vector.broadcast %75 : f32 to vector<1x8x128xf32>
      %94 = arith.select %87, %93, %92 : vector<1x8x128xi1>, vector<1x8x128xf32>
      %95 = vector.broadcast %70 : f32 to vector<1x8x128xf32>
      %96 = arith.select %85, %95, %94 : vector<1x8x128xi1>, vector<1x8x128xf32>
      %97 = vector.broadcast %65 : f32 to vector<1x8x128xf32>
      %98 = arith.select %83, %97, %96 : vector<1x8x128xi1>, vector<1x8x128xf32>
      %c0_54 = arith.constant 0 : index
      %c0_55 = arith.constant 0 : index
      %c0_56 = arith.constant 0 : index
      %99 = vector.load %arg7[%c0_54, %c0_55, %c0_56] : memref<1x8x128xf32, #tpu.memory_space<vmem>>, vector<1x8x128xf32>
      tpu.vector_store %arg7[%c0_54, %c0_55, %c0_56], %98 {strides = array<i32>} : memref<1x8x128xf32, #tpu.memory_space<vmem>>, vector<1x8x128xf32>,
    } else {
    }
    return
  }
  func.func @transform_0(%arg0: i32, %arg1: i32) -> (i32, i32) {
    %c0_i32 = arith.constant 0 : i32
    return %arg0, %arg1 : i32, i32
  }
  func.func @transform_1(%arg0: i32, %arg1: i32) -> (i32, i32) {
    %c0_i32 = arith.constant 0 : i32
    return %arg0, %arg1 : i32, i32
  }
  func.func @transform_2(%arg0: i32, %arg1: i32) -> (i32, i32) {
    %c0_i32 = arith.constant 0 : i32
    return %arg0, %arg1 : i32, i32
  }
  func.func @transform_3(%arg0: i32, %arg1: i32) -> (i32, i32) {
    %c0_i32 = arith.constant 0 : i32
    %c0_i32_0 = arith.constant 0 : i32
    return %arg0, %c0_i32 : i32, i32
  }
  func.func @transform_4(%arg0: i32, %arg1: i32) -> (i32, i32) {
    %c0_i32 = arith.constant 0 : i32
    %c0_i32_0 = arith.constant 0 : i32
    return %arg0, %c0_i32 : i32, i32
  }
  func.func @transform_5(%arg0: i32, %arg1: i32) -> (i32, i32, i32) {
    %c0_i32 = arith.constant 0 : i32
    %c0_i32_0 = arith.constant 0 : i32
    %c0_i32_1 = arith.constant 0 : i32
    return %arg0, %c0_i32, %c0_i32_0 : i32, i32, i32
  }
}

</mosaic_0001>

<llo_original>
// kernel: tpu_custom_call.1
$region0: #{tpu_custom_call.1}
  #allocation0 [shape = 'u32[]', space=smem, size = 0x4, offset = 0x4, fixed_abs, tag = 'smem constant byte address 0x4 - core index']
  #allocation1 [shape = 'u32[72,128]{1,0:T(1,128)}', space=vmem, size = 0x9000, scoped, tag = 'internal scratch']
  #allocation2 [shape = 'f32[8,1]{1,0:T(8,128)}', space=vmem, size = 0x1000, scoped, tag = 'scratch operand']
  #allocation3 [shape = 'f32[8,1]{1,0:T(8,128)}', space=vmem, size = 0x1000, scoped, tag = 'scratch operand']
  #allocation4 [shape = 'f32[8,1]{1,0:T(8,128)}', space=vmem, size = 0x1000, scoped, tag = 'scratch operand']
  #allocation5 [shape = 'f32[8,1]{1,0:T(8,128)}', space=vmem, size = 0x1000, scoped, tag = 'scratch operand']
  %s0 = inlined_call_operand.vmem [shape: bf16[8,256], index: 0, kind: input, shape index: {}]
  %s1 = inlined_call_operand.vmem [shape: bf16[8,256], index: 1, kind: input, shape index: {}]
  %s2 = inlined_call_operand.hbm [shape: bf16[8,256], index: 2, kind: input, shape index: {}]
  %s3 = inlined_call_operand.vmem [shape: f32[8,1], index: 3, kind: input, shape index: {}]
  %s4 = inlined_call_operand.vmem [shape: f32[8,1], index: 4, kind: input, shape index: {}]
  %s5 = inlined_call_operand.hbm [shape: f32[1,8,128], index: 5, kind: output, shape index: {}]
  %s6 = sld [smem:[#allocation0]]
  $region42: #{tpu_custom_call.1} parent=0
    _
  %s8 = ssub.s32 1, %s6
  %s9 = scalar_select 0, %s8, %s6
  $region1: #{tpu_custom_call.1} parent=0
    #allocation6 [shape = 'u8[4096]{0}', space=vmem, size = 0x1000, scoped, tag = 'input window, operand 2, single buffered']
    #allocation7 [shape = 's32[1]{0}', space=sflag, size = 0x4, scoped, tag = 'scoped memory for tpu_custom_call.1']
    #allocation8 [shape = 's32[1]{0}', space=sflag, size = 0x4, scoped, tag = 'scoped memory for tpu_custom_call.1']
    #allocation9 [shape = 'u8[4096]{0}', space=vmem, size = 0x1000, scoped, tag = 'output window, operand 0, single buffered']
    %10 = vsyncpa [#allocation7], 0
    %11 = vsyncpa [#allocation8], 0
    // Predicated region
    $region2: #{tpu_custom_call.1} parent=1 // pred_check
      _
    $region3: #{tpu_custom_call.1} parent=1 // pred_check_branch
      %13 = sbr.rel (0) target = $region5
    $region4: #{tpu_custom_call.1} parent=1 // pred_region
      _
    $region5: #{tpu_custom_call.1} parent=1 // pred_fallthru
      _
    // Predicated region
    $region6: #{tpu_custom_call.1} parent=1 // pred_check
      _
    $region7: #{tpu_custom_call.1} parent=1 // pred_check_branch
      %15 = sbr.rel (0) target = $region9
    $region8: #{tpu_custom_call.1} parent=1 // pred_region
      _
    $region9: #{tpu_custom_call.1} parent=1 // pred_fallthru
      _
    // Predicated region
    $region10: #{tpu_custom_call.1} parent=1 // pred_check
      _
    $region11: #{tpu_custom_call.1} parent=1 // pred_check_branch
      %17 = sbr.rel (0) target = $region13
    $region12: #{tpu_custom_call.1} parent=1 // pred_region
      %19 = vsyncadd [#allocation7], 0
      %s21 = sshll.u32 %s2, 4
      %s22 = int_to_ptr.hbm [resolvable:$true] %s21
      %s23 = sshll.u32 [#allocation6], 4
      %s24 = int_to_ptr.vmem [resolvable:$true] %s23
      %26 = dma.hbm_to_vmem [thread:$0]  %s22, 128, %s24, [#allocation7]
    $region13: #{tpu_custom_call.1} parent=1 // pred_fallthru
      _
    // Predicated region
    $region14: #{tpu_custom_call.1} parent=1 // pred_check
      _
    $region15: #{tpu_custom_call.1} parent=1 // pred_check_branch
      %28 = sbr.rel (0) target = $region17
    $region16: #{tpu_custom_call.1} parent=1 // pred_region
      _
    $region17: #{tpu_custom_call.1} parent=1 // pred_fallthru
      _
    // Predicated region
    $region18: #{tpu_custom_call.1} parent=1 // pred_check
      _
    $region19: #{tpu_custom_call.1} parent=1 // pred_check_branch
      %30 = sbr.rel (0) target = $region21
    $region20: #{tpu_custom_call.1} parent=1 // pred_region
      _
    $region21: #{tpu_custom_call.1} parent=1 // pred_fallthru
      _
    // Predicated region
    $region22: #{tpu_custom_call.1} parent=1 // pred_check
      _
    $region23: #{tpu_custom_call.1} parent=1 // pred_check_branch
      %32 = sbr.rel (0) target = $region25
    $region24: #{tpu_custom_call.1} parent=1 // pred_region
      %34 = dma.done [#allocation7], 128
    $region25: #{tpu_custom_call.1} parent=1 // pred_fallthru
      _
    %p35 = scmp.eq.s32.totalorder 0, 0
    // Predicated region
    $region26: #{tpu_custom_call.1} parent=1 // pred_check
      %p36 = pneg %p35
    $region27: #{tpu_custom_call.1} parent=1 // pred_check_branch
      %38 = sbr.rel (%p36) target = $region29
    $region28: #{tpu_custom_call.1} parent=1 // pred_region
      %vm39 = vcmask 7168
      %40 = vst.msk [vmem:[#allocation2] sm:$0xff] %vm39, 0.0
      %41 = vst.msk [vmem:[#allocation3] sm:$0xff] %vm39, 0.0
      %42 = vst.msk [vmem:[#allocation4] sm:$0xff] %vm39, 0.0
      %43 = vst.msk [vmem:[#allocation5] sm:$0xff] %vm39, 0.0
    $region29: #{tpu_custom_call.1} parent=1 // pred_fallthru
      _
    %v44 = vld [vmem:[%s0] sm:$0xff]
    %v45 = vunpack.c.l.bf16 %v44
    %v46 = vunpack.c.h.bf16 %v44
    %v47 = vld [vmem:[%s1] sm:$0xff]
    %v48 = vunpack.c.l.bf16 %v47
    %v49 = vunpack.c.h.bf16 %v47
    %v50 = vld [vmem:[#allocation6] sm:$0xff]
    %v51 = vunpack.c.l.bf16 %v50
    %v52 = vunpack.c.h.bf16 %v50
    %v53 = vld [vmem:[%s3] sm:$0xff]
    %v54 = vld [vmem:[%s4] sm:$0xff]
    %v55 = vmax.f32 %v45, 0.0
    %v56 = vmax.f32 %v46, 0.0
    %58 = vset.pattern.permute.xlu0 0
    %59 = vperm.xlu0 %58, %v53
    %v60 = vpop.permute.xlu0 %59
    %v62 = vmul.f32 %v45, %v60
    %v63 = vmul.f32 %v46, %v60
    %v64 = vsub.f32 %v55, %v62
    %v65 = vsub.f32 %v56, %v63
    %v66 = vand.u32 2147483647, %v45
    %v67 = vand.u32 2147483647, %v46
    %v68 = vsub.f32 0.0, %v66
    %v69 = vsub.f32 0.0, %v67
    %v70 = vmul.f32 %v68, 1.442695
    %v71 = vpow.pop %v70
    %v72 = vmul.f32 %v69, 1.442695
    %v73 = vpow.pop %v72
    %v74 = vadd.f32 %v71, 1.0
    %v75 = vlog2.pop %v74
    %v76 = vmul.f32 %v75, 0.6931472
    %v77 = vmul.f32 -0.5, %v71
    %v78 = vadd.f32 %v77, 1.0
    %v79 = vmul.f32 %v78, %v71
    %v80 = vand.u32 2147483647, %v71
    %vm81 = vcmp.lt.f32.partialorder %v80, 0.0004427343
    %v82 = vsel %vm81, %v79, %v76
    %v83 = vadd.f32 %v73, 1.0
    %v84 = vlog2.pop %v83
    %v85 = vmul.f32 %v84, 0.6931472
    %v86 = vmul.f32 -0.5, %v73
    %v87 = vadd.f32 %v86, 1.0
    %v88 = vmul.f32 %v87, %v73
    %v89 = vand.u32 2147483647, %v73
    %vm90 = vcmp.lt.f32.partialorder %v89, 0.0004427343
    %v91 = vsel %vm90, %v88, %v85
    %v92 = vadd.f32 %v64, %v82
    %v93 = vadd.f32 %v65, %v91
    %vm94 = vcmp.gt.f32.partialorder %v51, 0.5
    %vm95 = vcmp.gt.f32.partialorder %v52, 0.5
    %vm96 = vcmp.gt.f32.partialorder %v48, 0.3
    %vm97 = vcmp.gt.f32.partialorder %v49, 0.3
    %vm98 = vmand %vm94, %vm96
    %vm99 = vmand %vm95, %vm97
    %v100 = vld [vmem:[#allocation2] sm:$0xff]
    %v101 = vsel %vm98, %v92, 0.0
    %v102 = vsel %vm99, %v93, 0.0
    %v103 = vadd.f32 %v101, %v102
    %104 = vadd.xlane.f32.xlu0 %v103
    %v105 = vpop.xlane.xlu0 %104
    %v106 = vadd.f32 %v100, %v105
    %vm107 = vcmask 7168
    %108 = vst.msk [vmem:[#allocation2] sm:$0xff] %vm107, %v106
    %v109 = vld [vmem:[#allocation3] sm:$0xff]
    %v110 = vsel %vm98, 1.0, 0.0
    %v111 = vsel %vm99, 1.0, 0.0
    %v112 = vadd.f32 %v110, %v111
    %113 = vadd.xlane.f32.xlu0 %v112
    %v114 = vpop.xlane.xlu0 %113
    %v115 = vadd.f32 %v109, %v114
    %116 = vst.msk [vmem:[#allocation3] sm:$0xff] %vm107, %v115
    %v117 = vld [vmem:[#allocation4] sm:$0xff]
    %119 = vset.pattern.permute.xlu0 0
    %120 = vperm.xlu0 %119, %v54
    %v121 = vpop.permute.xlu0 %120
    %v123 = vmul.f32 %v92, %v121
    %v124 = vmul.f32 %v93, %v121
    %v125 = vsel %vm94, %v123, 0.0
    %v126 = vsel %vm95, %v124, 0.0
    %v127 = vadd.f32 %v125, %v126
    %128 = vadd.xlane.f32.xlu0 %v127
    %v129 = vpop.xlane.xlu0 %128
    %v130 = vadd.f32 %v117, %v129
    %131 = vst.msk [vmem:[#allocation4] sm:$0xff] %vm107, %v130
    %v132 = vld [vmem:[#allocation5] sm:$0xff]
    %v133 = vsel %vm94, 1.0, 0.0
    %v134 = vsel %vm95, 1.0, 0.0
    %v135 = vadd.f32 %v133, %v134
    %136 = vadd.xlane.f32.xlu0 %v135
    %v137 = vpop.xlane.xlu0 %136
    %v138 = vadd.f32 %v132, %v137
    %139 = vst.msk [vmem:[#allocation5] sm:$0xff] %vm107, %v138
    // Predicated region
    $region30: #{tpu_custom_call.1} parent=1 // pred_check
      %p140 = pneg %p35
    $region31: #{tpu_custom_call.1} parent=1 // pred_check_branch
      %142 = sbr.rel (%p140) target = $region33
    $region32: #{tpu_custom_call.1} parent=1 // pred_region
      %v143 = vld [vmem:[#allocation2] sm:$0xff]
      %v144 = vsel %vm107, %v143, 0.0
      %145 = vadd.xlane.f32.xlu0 %v144
      %v146 = vpop.xlane.xlu0 %145
      %v147 = vrot.slane %v146, 4
      %v148 = vadd.f32 %v146, %v147
      %v149 = vrot.slane %v148, 2
      %v150 = vadd.f32 %v148, %v149
      %v151 = vrot.slane %v150, 1
      %v152 = vadd.f32 %v150, %v151
      %s153 = vtos %v152
      %v154 = vld [vmem:[#allocation3] sm:$0xff]
      %v155 = vsel %vm107, %v154, 0.0
      %156 = vadd.xlane.f32.xlu0 %v155
      %v157 = vpop.xlane.xlu0 %156
      %v158 = vrot.slane %v157, 4
      %v159 = vadd.f32 %v157, %v158
      %v160 = vrot.slane %v159, 2
      %v161 = vadd.f32 %v159, %v160
      %v162 = vrot.slane %v161, 1
      %v163 = vadd.f32 %v161, %v162
      %s164 = vtos %v163
      %v165 = vld [vmem:[#allocation4] sm:$0xff]
      %v166 = vsel %vm107, %v165, 0.0
      %167 = vadd.xlane.f32.xlu0 %v166
      %v168 = vpop.xlane.xlu0 %167
      %v169 = vrot.slane %v168, 4
      %v170 = vadd.f32 %v168, %v169
      %v171 = vrot.slane %v170, 2
      %v172 = vadd.f32 %v170, %v171
      %v173 = vrot.slane %v172, 1
      %v174 = vadd.f32 %v172, %v173
      %s175 = vtos %v174
      %v176 = vld [vmem:[#allocation5] sm:$0xff]
      %v177 = vsel %vm107, %v176, 0.0
      %178 = vadd.xlane.f32.xlu0 %v177
      %v179 = vpop.xlane.xlu0 %178
      %v180 = vrot.slane %v179, 4
      %v181 = vadd.f32 %v179, %v180
      %v182 = vrot.slane %v181, 2
      %v183 = vadd.f32 %v181, %v182
      %v184 = vrot.slane %v183, 1
      %v185 = vadd.f32 %v183, %v184
      %s186 = vtos %v185
      %v187 = vlaneseq
      %v188 = vand.u32 %v187, 127
      %vm189 = vcmp.eq.s32.totalorder %v188, 0
      %vm190 = vcmp.eq.s32.totalorder %v188, 1
      %vm191 = vcmp.eq.s32.totalorder %v188, 2
      %vm192 = vcmp.eq.s32.totalorder %v188, 3
      %v193 = vstv %s186
      %v194 = vsel %vm192, %v193, 0.0
      %v195 = vstv %s175
      %v196 = vsel %vm191, %v195, %v194
      %v197 = vstv %s164
      %v198 = vsel %vm190, %v197, %v196
      %v199 = vstv %s153
      %v200 = vsel %vm189, %v199, %v198
      %201 = vst [vmem:[#allocation9] sm:$0xff] %v200
    $region33: #{tpu_custom_call.1} parent=1 // pred_fallthru
      _
    // Predicated region
    $region34: #{tpu_custom_call.1} parent=1 // pred_check
      _
    $region35: #{tpu_custom_call.1} parent=1 // pred_check_branch
      %203 = sbr.rel (0) target = $region37
    $region36: #{tpu_custom_call.1} parent=1 // pred_region
      %205 = vsyncadd [#allocation8], 0
      %s207 = sshll.u32 [#allocation9], 4
      %s208 = int_to_ptr.vmem [resolvable:$true] %s207
      %s209 = sshll.u32 %s5, 4
      %s210 = int_to_ptr.hbm [resolvable:$true] %s209
      %212 = dma.vmem_to_hbm [thread:$0]  %s208, 128, %s210, [#allocation8]
    $region37: #{tpu_custom_call.1} parent=1 // pred_fallthru
      _
    // Predicated region
    $region38: #{tpu_custom_call.1} parent=1 // pred_check
      _
    $region39: #{tpu_custom_call.1} parent=1 // pred_check_branch
      %214 = sbr.rel (0) target = $region41
    $region40: #{tpu_custom_call.1} parent=1 // pred_region
      %216 = dma.done [#allocation8], 128
    $region41: #{tpu_custom_call.1} parent=1 // pred_fallthru
      _
    %217 = vsyncpa [#allocation7], 1
    %218 = vsyncpa [#allocation8], 1

</llo_original>
